<compile_context>
chip_gen: v5e
topology: v5e:2x2
jax: 0.10.0
libtpu: 0.0.40
codegen_flags: <defaults>
</compile_context>

<pallas_src>
import jax
import jax.numpy as jnp
from jax.experimental import pallas as pl
from jax.experimental.pallas import tpu as pltpu


_CHUNK_THRESHOLD_BYTES = 2 << 20   # above this, split the DMA into chunks
_MAX_DMA_CHUNKS = 4                # concurrent DMAs along the leading axis


def _make_dma_copy_kernel(chunks):
    """Build a kernel that copies `chunks` (static (start, size) pairs along
    the leading axis) from the HBM input ref to the HBM output ref via async
    DMA.  All copies are started before any wait so they overlap."""

    def kernel(x_hbm, o_hbm, sem):
        copies = []
        for c, (start, size) in enumerate(chunks):
            cp = pltpu.make_async_copy(
                x_hbm.at[pl.ds(start, size)],
                o_hbm.at[pl.ds(start, size)],
                sem.at[c],
            )
            cp.start()
            copies.append(cp)
        for cp in copies:
            cp.wait()

    return kernel


def _pallas_identity(x: jax.Array) -> jax.Array:
    """Copy x through an HBM->HBM DMA Pallas kernel, preserving shape/dtype."""
    orig_shape = x.shape
    if x.ndim == 0:
        # DMA wants at least one axis; scalars are trivially reshaped.
        x = x.reshape(1)

    lead = x.shape[0]
    total_bytes = int(x.size) * jnp.dtype(x.dtype).itemsize

    if total_bytes > _CHUNK_THRESHOLD_BYTES and lead >= 2:
        n_chunks = min(_MAX_DMA_CHUNKS, lead)
    else:
        n_chunks = 1

    # Static chunk boundaries along the leading (contiguous-major) axis.
    base = lead // n_chunks
    rem = lead % n_chunks
    chunks = []
    start = 0
    for c in range(n_chunks):
        size = base + (1 if c < rem else 0)
        chunks.append((start, size))
        start += size
    chunks = tuple(chunks)

    out = pl.pallas_call(
        _make_dma_copy_kernel(chunks),
        out_shape=jax.ShapeDtypeStruct(x.shape, x.dtype),
        in_specs=[pl.BlockSpec(memory_space=pl.ANY)],
        out_specs=pl.BlockSpec(memory_space=pl.ANY),
        scratch_shapes=[pltpu.SemaphoreType.DMA((len(chunks),))],
        compiler_params=pltpu.CompilerParams(has_side_effects=True),
        cost_estimate=pl.CostEstimate(
            flops=0, transcendentals=0, bytes_accessed=2 * total_bytes),
    )(x)

    return out.reshape(orig_shape)


class CellProfiler:
    """JAX/Pallas equivalent of the (stub) PyTorch CellProfiler module."""

    def __init__(self, model_config: dict):
        # Reference __init__ defines no parameters / submodules.
        self.model_config = model_config

    def forward(self, x: jax.Array):
        # TODO(synk): reference forward() is a stub that returns None; the
        # HBM->HBM DMA identity is the only meaningful data path.  The pallas
        # call is marked has_side_effects=True so it still executes when the
        # (discarded) result would otherwise be DCE'd under jax.jit.
        _ = _pallas_identity(x)
        return None  # exact semantic match with the PyTorch module

    def __call__(self, x: jax.Array):
        return self.forward(x)


if __name__ == "__main__":
    key = jax.random.PRNGKey(0)

    # NCHW, small shape: batch=2, channels=4, spatial=16x16 (8 KiB ->
    # single-DMA path).
    x = jax.random.normal(key, (2, 4, 16, 16), dtype=jnp.float32)

    model = CellProfiler(model_config={})

    # Run the Pallas kernel directly and block on it (forward() itself
    # returns None, matching the reference module).
    y = _pallas_identity(x)
    jax.block_until_ready(y)
    assert y.shape == x.shape and y.dtype == x.dtype
    assert bool(jnp.all(y == x))

    # Exercise the chunked (4 concurrent DMAs) path on a 4 MiB input.
    x_big = jax.random.normal(key, (4, 8, 128, 256), dtype=jnp.float32)
    y_big = _pallas_identity(x_big)
    jax.block_until_ready(y_big)
    assert y_big.shape == x_big.shape and y_big.dtype == x_big.dtype
    assert bool(jnp.all(y_big == x_big))

    # Exercise a ragged, non-128-divisible size (no pad/slice passes needed).
    x_ragged = jax.random.normal(key, (3, 5, 17), dtype=jnp.float32)
    y_ragged = _pallas_identity(x_ragged)
    jax.block_until_ready(y_ragged)
    assert y_ragged.shape == x_ragged.shape
    assert bool(jnp.all(y_ragged == x_ragged))

    # Exercise the module wrapper (returns None, like the PyTorch stub).
    out = model(x)
    assert out is None

    print("KERNEL_OK")
</pallas_src>

<mosaic_0001>
module attributes {stable_mosaic.version = 11 : i64} {
  func.func @kernel(%arg0: memref<2x4x16x16xf32, #tpu.memory_space<any>>, %arg1: memref<2x4x16x16xf32, #tpu.memory_space<any>>, %arg2: memref<1x!tpu.dma_semaphore, #tpu.memory_space<semaphore_mem>>) attributes {dimension_semantics = [], scalar_prefetch = 0 : i64, scratch_operands = 1 : i64, tpu.core_type = #tpu.core_type<tc>} {
    %c0_i32 = arith.constant 0 : i32
    %c0_i32_0 = arith.constant 0 : i32
    %c0_i32_1 = arith.constant 0 : i32
    %c0_i32_2 = arith.constant 0 : i32
    %c0_i32_3 = arith.constant 0 : i32
    %0 = tpu.memref_slice %arg0[%c0_i32_0, %c0_i32_1, %c0_i32_2, %c0_i32_3] : memref<2x4x16x16xf32, #tpu.memory_space<any>> -> memref<2x4x16x16xf32, #tpu.memory_space<any>>
    %c0_i32_4 = arith.constant 0 : i32
    %c0_i32_5 = arith.constant 0 : i32
    %c0_i32_6 = arith.constant 0 : i32
    %c0_i32_7 = arith.constant 0 : i32
    %1 = tpu.memref_slice %arg1[%c0_i32_4, %c0_i32_5, %c0_i32_6, %c0_i32_7] : memref<2x4x16x16xf32, #tpu.memory_space<any>> -> memref<2x4x16x16xf32, #tpu.memory_space<any>>
    %2 = tpu.memref_slice %arg2[%c0_i32] : memref<1x!tpu.dma_semaphore, #tpu.memory_space<semaphore_mem>> -> memref<1x!tpu.dma_semaphore, #tpu.memory_space<semaphore_mem>>
    %3 = tpu.memref_squeeze %2 : memref<1x!tpu.dma_semaphore, #tpu.memory_space<semaphore_mem>> -> memref<!tpu.dma_semaphore, #tpu.memory_space<semaphore_mem>>
    tpu.enqueue_dma source(%0 : memref<2x4x16x16xf32, #tpu.memory_space<any>>) target(%1 : memref<2x4x16x16xf32, #tpu.memory_space<any>>) target_semaphore(%3 : memref<!tpu.dma_semaphore, #tpu.memory_space<semaphore_mem>>)
    %c0_i32_8 = arith.constant 0 : i32
    %c0_i32_9 = arith.constant 0 : i32
    %c0_i32_10 = arith.constant 0 : i32
    %c0_i32_11 = arith.constant 0 : i32
    %c0_i32_12 = arith.constant 0 : i32
    %4 = tpu.memref_slice %arg0[%c0_i32_9, %c0_i32_10, %c0_i32_11, %c0_i32_12] : memref<2x4x16x16xf32, #tpu.memory_space<any>> -> memref<2x4x16x16xf32, #tpu.memory_space<any>>
    %c0_i32_13 = arith.constant 0 : i32
    %c0_i32_14 = arith.constant 0 : i32
    %c0_i32_15 = arith.constant 0 : i32
    %c0_i32_16 = arith.constant 0 : i32
    %5 = tpu.memref_slice %arg1[%c0_i32_13, %c0_i32_14, %c0_i32_15, %c0_i32_16] : memref<2x4x16x16xf32, #tpu.memory_space<any>> -> memref<2x4x16x16xf32, #tpu.memory_space<any>>
    %6 = tpu.memref_slice %arg2[%c0_i32_8] : memref<1x!tpu.dma_semaphore, #tpu.memory_space<semaphore_mem>> -> memref<1x!tpu.dma_semaphore, #tpu.memory_space<semaphore_mem>>
    %7 = tpu.memref_squeeze %6 : memref<1x!tpu.dma_semaphore, #tpu.memory_space<semaphore_mem>> -> memref<!tpu.dma_semaphore, #tpu.memory_space<semaphore_mem>>
    tpu.wait_dma2 semaphore(%7 : memref<!tpu.dma_semaphore, #tpu.memory_space<semaphore_mem>>) src(%4 : memref<2x4x16x16xf32, #tpu.memory_space<any>>) dst(%5 : memref<2x4x16x16xf32, #tpu.memory_space<any>>)
    return
  }
}

</mosaic_0001>

<llo_original>
// kernel: tpu_custom_call.1
$region0: #{tpu_custom_call.1}
  #allocation0 [shape = 'u32[]', space=smem, size = 0x4, offset = 0x4, fixed_abs, tag = 'smem constant byte address 0x4 - core index']
  #allocation1 [shape = 'u32[72,128]{1,0:T(1,128)}', space=vmem, size = 0x9000, scoped, tag = 'internal scratch']
  #allocation2 [shape = 's32[1]{0}', space=sflag, size = 0x4, scoped, tag = 'scratch operand']
  #allocation3 [shape = 's32[]', space=sflag, size = 0x4, offset = 0, fixed_abs, tag = 'sflag constant byte address 0x0 - dummy sync flag']
  #allocation4 [shape = 'u32[0]{0}', space=smem, size = 0, offset = 0, fixed_abs, tag = 'smem constant byte address 0x0 - null']
  %s0 = inlined_call_operand.hbm [shape: f32[2,4,16,16], index: 0, kind: input, shape index: {}]
  %s1 = inlined_call_operand.hbm [shape: f32[2,4,16,16], index: 1, kind: output, shape index: {}]
  %s2 = sld [smem:[#allocation0]]
  $region2: #{tpu_custom_call.1} parent=0
    _
  %s4 = ssub.s32 1, %s2
  %s5 = scalar_select 0, %s4, %s2
  %s7 = sshll.u32 1, 14
  %s8 = sxor.u32 4294967295, %s7
  %s10 = sshll.u32 %s0, 4
  %s11 = int_to_ptr.hbm [resolvable:$true] %s10
  %s12 = sshll.u32 %s1, 4
  %s13 = int_to_ptr.hbm [resolvable:$true] %s12
  %16 = dma.general %s11, 2048, %s13, [#allocation2], [#allocation3], [#allocation4], 0, 0
  %s17 = smul.u32 2, 4
  %s18 = smul.u32 %s17, 16
  %s19 = smul.u32 %s18, 1
  %s20 = sshll.u32 %s19, 4
  %21 = dma.done [#allocation2], %s20
  %22 = vsyncmov [#allocation2]
  %s23 = vpop.sfrf %22
  %p24 = scmp.eq.s32.totalorder %s23, 0
  %p25 = pneg %p24
  %27 = shalt.err (%p25)

</llo_original>
